<compile_context>
chip_gen: v7x
topology: tpu7x:2x2x1
jax: 0.10.0
libtpu: 0.0.40
codegen_flags: <defaults>
</compile_context>

<pallas_src>
import math

import jax
import jax.numpy as jnp
from jax.experimental import pallas as pl
from jax.experimental.pallas import tpu as pltpu


_MiB = 1024 * 1024
# Conservative resident-footprint budget across v5e/v6e (128 MiB) and v7x (64 MiB).
_VMEM_BUDGET = 40 * _MiB


def _round_up(x, m):
    return ((x + m - 1) // m) * m


def _vmem_limit(footprint_bytes):
    # Explicit limit (v5e default scoped limit is only 16 MiB); never above
    # 48 MiB so a v7x-tuned run does not overshoot its 64 MiB physical VMEM.
    return int(max(32 * _MiB, min(48 * _MiB, footprint_bytes + 8 * _MiB)))


def _largest_mult128_divisor(n_p, cap):
    """Largest multiple-of-128 divisor of n_p (n_p is a multiple of 128), <= cap."""
    q = n_p // 128
    best = 128
    d = 1
    while d * d <= q:
        if q % d == 0:
            for f in (d, q // d):
                t = f * 128
                if best < t <= cap:
                    best = t
        d += 1
    return best


# ---------------------------------------------------------------------------
# Pass 1: support = X @ W   (weight fully resident, rows tiled)
# ---------------------------------------------------------------------------
def _xw_kernel(x_ref, w_ref, s_ref):
    s_ref[...] = jnp.dot(
        x_ref[...], w_ref[...], preferred_element_type=jnp.float32
    ).astype(s_ref.dtype)


# ---------------------------------------------------------------------------
# Pass 2 (primary): out = adj_row_stripe @ support (+ bias), support resident
# ---------------------------------------------------------------------------
def _agg_bias_kernel(adj_ref, s_ref, b_ref, o_ref):
    o_ref[...] = (
        jnp.dot(adj_ref[...], s_ref[...], preferred_element_type=jnp.float32)
        + b_ref[...]
    ).astype(o_ref.dtype)


def _agg_kernel(adj_ref, s_ref, o_ref):
    o_ref[...] = jnp.dot(
        adj_ref[...], s_ref[...], preferred_element_type=jnp.float32
    ).astype(o_ref.dtype)


# ---------------------------------------------------------------------------
# Pass 2 (fallback, huge N): k-tiled, accumulate directly into o_ref
# ---------------------------------------------------------------------------
def _agg_tiled_bias_kernel(adj_ref, s_ref, b_ref, o_ref):
    k = pl.program_id(1)

    @pl.when(k == 0)
    def _init():
        o_ref[...] = jnp.zeros_like(o_ref)

    o_ref[...] += jnp.dot(
        adj_ref[...], s_ref[...], preferred_element_type=jnp.float32
    )

    @pl.when(k == pl.num_programs(1) - 1)
    def _finalize():
        o_ref[...] += b_ref[...]


def _agg_tiled_kernel(adj_ref, s_ref, o_ref):
    k = pl.program_id(1)

    @pl.when(k == 0)
    def _init():
        o_ref[...] = jnp.zeros_like(o_ref)

    o_ref[...] += jnp.dot(
        adj_ref[...], s_ref[...], preferred_element_type=jnp.float32
    )


def graph_convolution(x, adj, weight, bias=None, *,
                      force_k_tiled=False, tiled_m_cap=512, tiled_k_cap=2048):
    """GCN layer forward: adj @ (x @ weight) (+ bias).

    x: [N, F_in], adj: [N, N], weight: [F_in, F_out], bias: [F_out] or None.
    """
    N, F_in = x.shape
    F_out = weight.shape[1]
    assert adj.shape == (N, N)
    assert weight.shape == (F_in, F_out)

    # Lane-dense output / weight: pad F_out up to a multiple of 128 (tiny).
    F_out_p = _round_up(F_out, 128)
    w_p = jnp.pad(weight.astype(jnp.float32), ((0, 0), (0, F_out_p - F_out)))
    b_p = None
    if bias is not None:
        assert bias.shape == (F_out,)
        b_p = jnp.pad(bias.astype(jnp.float32),
                      (0, F_out_p - F_out)).reshape(1, F_out_p)

    # ---- pass 1: support = X @ W (rows tiled, weight resident) -------------
    def run_pass1(x_in):
        n_rows = x_in.shape[0]
        tm1 = n_rows if n_rows <= 512 else 512

        def p1_fp(t):
            return 2 * 4 * (t * F_in + F_in * F_out_p + t * F_out_p)

        while tm1 > 128 and tm1 % 128 == 0 and p1_fp(tm1) > _VMEM_BUDGET:
            tm1 //= 2

        return pl.pallas_call(
            _xw_kernel,
            out_shape=jax.ShapeDtypeStruct((n_rows, F_out_p), jnp.float32),
            grid=(pl.cdiv(n_rows, tm1),),
            in_specs=[
                pl.BlockSpec((tm1, F_in), lambda i: (i, 0)),
                pl.BlockSpec((F_in, F_out_p), lambda i: (0, 0)),  # resident W
            ],
            out_specs=pl.BlockSpec((tm1, F_out_p), lambda i: (i, 0)),
            compiler_params=pltpu.CompilerParams(
                dimension_semantics=("parallel",),
                vmem_limit_bytes=_vmem_limit(p1_fp(tm1)),
            ),
        )(x_in, w_p)

    # ---- pass 2 tile selection ----------------------------------------------
    def p2_resident_fp(tm):
        return 2 * 4 * (tm * N + N * F_out_p + tm * F_out_p + F_out_p)

    tm2 = None
    if not force_k_tiled:
        if N <= 128:
            candidates = (N,)
        else:
            # Keep >= 2 row tiles so v7x's two TensorCores both get work.
            candidates = tuple(c for c in (512, 256, 128)
                               if 2 * c <= _round_up(N, 128))
        for cand in candidates:
            if p2_resident_fp(cand) <= _VMEM_BUDGET:
                tm2 = cand
                break

    if tm2 is not None:
        # ---- primary path: support fully VMEM-resident, no adj/x padding ---
        support = run_pass1(x)                       # (N, F_out_p) f32
        grid2 = (pl.cdiv(N, tm2),)
        adj_spec = pl.BlockSpec((tm2, N), lambda i: (i, 0))       # row stripe
        s_spec = pl.BlockSpec((N, F_out_p), lambda i: (0, 0))     # resident
        out_spec = pl.BlockSpec((tm2, F_out_p), lambda i: (i, 0))
        out_shape = jax.ShapeDtypeStruct((N, F_out_p), jnp.float32)
        cparams = pltpu.CompilerParams(
            dimension_semantics=("parallel",),
            vmem_limit_bytes=_vmem_limit(p2_resident_fp(tm2)),
        )
        if bias is not None:
            out_p = pl.pallas_call(
                _agg_bias_kernel, out_shape=out_shape, grid=grid2,
                in_specs=[adj_spec, s_spec,
                          pl.BlockSpec((1, F_out_p), lambda i: (0, 0))],
                out_specs=out_spec, compiler_params=cparams,
            )(adj, support, b_p)
        else:
            out_p = pl.pallas_call(
                _agg_kernel, out_shape=out_shape, grid=grid2,
                in_specs=[adj_spec, s_spec],
                out_specs=out_spec, compiler_params=cparams,
            )(adj, support)
    else:
        # ---- fallback path (support cannot stay resident): k-tiled ---------
        # Pad N only to a multiple of 128 (review: drastically shrink the pad).
        N_p = _round_up(N, 128)
        x_p = x if N_p == N else jnp.pad(x, ((0, N_p - N), (0, 0)))
        adj_p = adj if N_p == N else jnp.pad(adj, ((0, N_p - N), (0, N_p - N)))
        support = run_pass1(x_p)                     # (N_p, F_out_p), pad rows = 0

        tk = _largest_mult128_divisor(N_p, tiled_k_cap)
        tm = _largest_mult128_divisor(N_p, min(tiled_m_cap, max(128, N_p // 2)))
        grid2 = (N_p // tm, N_p // tk)
        adj_spec = pl.BlockSpec((tm, tk), lambda i, k: (i, k))
        s_spec = pl.BlockSpec((tk, F_out_p), lambda i, k: (k, 0))
        out_spec = pl.BlockSpec((tm, F_out_p), lambda i, k: (i, 0))
        out_shape = jax.ShapeDtypeStruct((N_p, F_out_p), jnp.float32)
        fp = 2 * 4 * (tm * tk + tk * F_out_p + tm * F_out_p + F_out_p)
        cparams = pltpu.CompilerParams(
            dimension_semantics=("parallel", "arbitrary"),
            vmem_limit_bytes=_vmem_limit(fp),
        )
        if bias is not None:
            out_p = pl.pallas_call(
                _agg_tiled_bias_kernel, out_shape=out_shape, grid=grid2,
                in_specs=[adj_spec, s_spec,
                          pl.BlockSpec((1, F_out_p), lambda i, k: (0, 0))],
                out_specs=out_spec, compiler_params=cparams,
            )(adj_p, support, b_p)
        else:
            out_p = pl.pallas_call(
                _agg_tiled_kernel, out_shape=out_shape, grid=grid2,
                in_specs=[adj_spec, s_spec],
                out_specs=out_spec, compiler_params=cparams,
            )(adj_p, support)

    return out_p[:N, :F_out]


def _reference(x, adj, weight, bias):
    out = adj @ (x @ weight)
    return out if bias is None else out + bias[None, :]


if __name__ == "__main__":
    key = jax.random.PRNGKey(0)

    def make_inputs(k, N, F_in, F_out):
        kx, ka, kw, kb = jax.random.split(k, 4)
        x = jax.random.normal(kx, (N, F_in), dtype=jnp.float32)
        adj = jax.random.uniform(ka, (N, N), dtype=jnp.float32)
        # Mirror reset_parameters(): uniform(-stdv, stdv), stdv = 1/sqrt(F_out)
        stdv = 1.0 / math.sqrt(F_out)
        w = jax.random.uniform(kw, (F_in, F_out), dtype=jnp.float32,
                               minval=-stdv, maxval=stdv)
        b = jax.random.uniform(kb, (F_out,), dtype=jnp.float32,
                               minval=-stdv, maxval=stdv)
        return x, adj, w, b

    k1, k2, k3 = jax.random.split(key, 3)

    # 1) tiny single-tile shape, bias on (resident-support primary path).
    x, adj, w, b = make_inputs(k1, N=16, F_in=32, F_out=8)
    out = jax.block_until_ready(graph_convolution(x, adj, w, b))
    assert out.shape == (16, 8)
    assert jnp.allclose(out, _reference(x, adj, w, b),
                        atol=1e-3, rtol=1e-3), "bias path mismatch"

    # 2) bias=False path (no zeros bias array built or DMA'd).
    out_nb = jax.block_until_ready(graph_convolution(x, adj, w, None))
    assert jnp.allclose(out_nb, _reference(x, adj, w, None),
                        atol=1e-3, rtol=1e-3), "no-bias path mismatch"

    # 3) non-128-aligned N: several row tiles (last one ragged) with NO
    #    host-side padding of adj or x.
    x2, adj2, w2, b2 = make_inputs(k2, N=600, F_in=48, F_out=8)
    out2 = jax.block_until_ready(graph_convolution(x2, adj2, w2, b2))
    assert out2.shape == (600, 8)
    assert jnp.allclose(out2, _reference(x2, adj2, w2, b2),
                        atol=2e-3, rtol=2e-3), "ragged primary path mismatch"

    # 4) force the k-tiled fallback (used when support can't stay resident)
    #    with small tile caps so the k-accumulation loop is exercised.
    x3, adj3, w3, b3 = make_inputs(k3, N=384, F_in=32, F_out=8)
    out3 = jax.block_until_ready(
        graph_convolution(x3, adj3, w3, b3, force_k_tiled=True,
                          tiled_m_cap=128, tiled_k_cap=128))
    assert out3.shape == (384, 8)
    assert jnp.allclose(out3, _reference(x3, adj3, w3, b3),
                        atol=2e-3, rtol=2e-3), "k-tiled fallback mismatch"

    # TODO(synk): optional bf16 storage of `support` (halves its HBM/VMEM cost)
    # is a numerics tradeoff and is intentionally not enabled.
    print("KERNEL_OK")
</pallas_src>

<mosaic_0001>
module attributes {stable_mosaic.version = 11 : i64} {
  func.func @_xw_kernel(%arg0: i32, %arg1: memref<16x32xf32, #tpu.memory_space<vmem>>, %arg2: memref<32x128xf32, #tpu.memory_space<vmem>>, %arg3: memref<16x128xf32, #tpu.memory_space<vmem>>) attributes {dimension_semantics = [#tpu.dimension_semantics<parallel>], iteration_bounds = array<i64: 1>, scalar_prefetch = 0 : i64, scratch_operands = 0 : i64, tpu.core_type = #tpu.core_type<tc>, window_params = [{transform_indices = @transform_0, window_bounds = array<i64: 16, 32>}, {pipeline_mode = #tpu.pipeline_mode<synchronous>, transform_indices = @transform_1, window_bounds = array<i64: 32, 128>}, {transform_indices = @transform_2, window_bounds = array<i64: 16, 128>}]} {
    %c0 = arith.constant 0 : index
    %c0_0 = arith.constant 0 : index
    %0 = vector.load %arg1[%c0, %c0_0] : memref<16x32xf32, #tpu.memory_space<vmem>>, vector<16x32xf32>
    %c0_1 = arith.constant 0 : index
    %c0_2 = arith.constant 0 : index
    %1 = vector.load %arg2[%c0_1, %c0_2] : memref<32x128xf32, #tpu.memory_space<vmem>>, vector<32x128xf32>
    %cst = arith.constant dense<0.000000e+00> : vector<16x128xf32>
    %2 = tpu.matmul %0, %1, %cst {dimension_numbers = #tpu.dot_dimension_numbers<[1], [0], [0], [1], [0, 0, 1, 1], [], []>} : vector<16x32xf32>, vector<32x128xf32>, vector<16x128xf32> -> vector<16x128xf32>
    %c0_3 = arith.constant 0 : index
    %c0_4 = arith.constant 0 : index
    %3 = vector.load %arg3[%c0_3, %c0_4] : memref<16x128xf32, #tpu.memory_space<vmem>>, vector<16x128xf32>
    tpu.vector_store %arg3[%c0_3, %c0_4], %2 {strides = array<i32>} : memref<16x128xf32, #tpu.memory_space<vmem>>, vector<16x128xf32>,
    return
  }
  func.func @transform_0(%arg0: i32) -> (i32, i32) {
    %c0_i32 = arith.constant 0 : i32
    %c0_i32_0 = arith.constant 0 : i32
    return %arg0, %c0_i32 : i32, i32
  }
  func.func @transform_1(%arg0: i32) -> (i32, i32) {
    %c0_i32 = arith.constant 0 : i32
    %c0_i32_0 = arith.constant 0 : i32
    %c0_i32_1 = arith.constant 0 : i32
    return %c0_i32, %c0_i32_0 : i32, i32
  }
  func.func @transform_2(%arg0: i32) -> (i32, i32) {
    %c0_i32 = arith.constant 0 : i32
    %c0_i32_0 = arith.constant 0 : i32
    return %arg0, %c0_i32 : i32, i32
  }
}

</mosaic_0001>

<llo_original>
// kernel: tpu_custom_call.1
$region0: #{tpu_custom_call.1}
  #allocation0 [shape = 'u32[]', space=smem, size = 0x4, offset = 0x4, fixed_abs, tag = 'smem constant byte address 0x4 - core index']
  #allocation1 [shape = 'u32[144,128]{1,0:T(1,128)}', space=vmem, size = 0x12000, scoped, tag = 'internal scratch']
  %s0 = inlined_call_operand.hbm [shape: f32[16,32], index: 0, kind: input, shape index: {}]
  %s1 = inlined_call_operand.hbm [shape: f32[32,128], index: 1, kind: input, shape index: {}]
  %s2 = inlined_call_operand.hbm [shape: f32[16,128], index: 2, kind: output, shape index: {}]
  %s3 = sld [smem:[#allocation0]]
  $region26: #{tpu_custom_call.1} parent=0
    _
  %s5 = ssub.s32 1, %s3
  %s6 = scalar_select 0, %s5, %s3
  $region1: #{tpu_custom_call.1} parent=0
    #allocation2 [shape = 'u8[8192]{0}', space=vmem, size = 0x2000, scoped, tag = 'input window, operand 0, single buffered']
    #allocation3 [shape = 's32[1]{0}', space=sflag, size = 0x4, scoped, tag = 'scoped memory for tpu_custom_call.1']
    #allocation4 [shape = 's32[1]{0}', space=sflag, size = 0x4, scoped, tag = 'scoped memory for tpu_custom_call.1']
    #allocation5 [shape = 'u8[16384]{0}', space=vmem, size = 0x4000, scoped, tag = 'input window, operand 1, single buffered']
    #allocation6 [shape = 's32[1]{0}', space=sflag, size = 0x4, scoped, tag = 'scoped memory for tpu_custom_call.1']
    #allocation7 [shape = 'u8[8192]{0}', space=vmem, size = 0x2000, scoped, tag = 'output window, operand 0, single buffered']
    %7 = vsyncpa [#allocation3], 0
    %8 = vsyncpa [#allocation6], 0
    %9 = vsyncpa [#allocation4], 0
    // Predicated region
    $region2: #{tpu_custom_call.1} parent=1 // pred_check
      _
    $region3: #{tpu_custom_call.1} parent=1 // pred_check_branch
      %11 = sbr.rel (0) target = $region5
    $region4: #{tpu_custom_call.1} parent=1 // pred_region
      %s13 = ssub.s32 256, 256
      %14 = vsyncadd [#allocation3], %s13
      %s15 = sshll.u32 [#allocation2], 4
      %s16 = int_to_ptr.vmem [resolvable:$true] %s15
      %21 = dma.hbm_to_vmem [thread:$0]  %s0, 256, %s16, [#allocation3], 128, 128, 8
    $region5: #{tpu_custom_call.1} parent=1 // pred_fallthru
      _
    // Predicated region
    $region6: #{tpu_custom_call.1} parent=1 // pred_check
      _
    $region7: #{tpu_custom_call.1} parent=1 // pred_check_branch
      %23 = sbr.rel (0) target = $region9
    $region8: #{tpu_custom_call.1} parent=1 // pred_region
      %s25 = ssub.s32 512, 512
      %26 = vsyncadd [#allocation6], %s25
      %s27 = sshll.u32 [#allocation5], 4
      %s28 = int_to_ptr.vmem [resolvable:$true] %s27
      %33 = dma.hbm_to_vmem [thread:$0]  %s1, 512, %s28, [#allocation6], 128, 128, 8
    $region9: #{tpu_custom_call.1} parent=1 // pred_fallthru
      _
    // Predicated region
    $region10: #{tpu_custom_call.1} parent=1 // pred_check
      _
    $region11: #{tpu_custom_call.1} parent=1 // pred_check_branch
      %35 = sbr.rel (0) target = $region13
    $region12: #{tpu_custom_call.1} parent=1 // pred_region
      %36 = dma.done [#allocation3], 256
    $region13: #{tpu_custom_call.1} parent=1 // pred_fallthru
      _
    // Predicated region
    $region14: #{tpu_custom_call.1} parent=1 // pred_check
      _
    $region15: #{tpu_custom_call.1} parent=1 // pred_check_branch
      %38 = sbr.rel (0) target = $region17
    $region16: #{tpu_custom_call.1} parent=1 // pred_region
      %39 = dma.done [#allocation6], 512
    $region17: #{tpu_custom_call.1} parent=1 // pred_fallthru
      _
    %v40 = vld [vmem:[#allocation2] sm:$0xff]
    %v41 = vld [vmem:[#allocation2 + $0x8] sm:$0xff]
    %v42 = vld [vmem:[#allocation5] sm:$0xff]
    %v43 = vld [vmem:[#allocation5 + $0x8] sm:$0xff]
    %v44 = vld [vmem:[#allocation5 + $0x10] sm:$0xff]
    %v45 = vld [vmem:[#allocation5 + $0x18] sm:$0xff]
    %vm46 = vcmask 261120
    %v48 = vsel %vm46, %v40, 0
    %v51 = vsel %vm46, %v41, 0
    %53 = vmatprep.subr.mxu0 0.0
    %54 = vmatpush1.msra.mxu0 %v42
    %55 = vmatprep.subr.mxu0 0.0
    %56 = vmatpush1.msra.mxu0 %v43
    %57 = vmatprep.subr.mxu0 0.0
    %58 = vmatpush1.msra.mxu0 %v44
    %59 = vmatprep.subr.mxu0 0.0
    %60 = vmatpush1.msra.mxu0 %v45
    %61 = vmatprep.subr.mxu0 0.0
    %62 = vmatpush1.msra.mxu0 0.0
    %63 = vmatprep.subr.mxu0 0.0
    %64 = vmatpush1.msra.mxu0 0.0
    %65 = vmatprep.subr.mxu0 0.0
    %66 = vmatpush1.msra.mxu0 0.0
    %67 = vmatprep.subr.mxu0 0.0
    %68 = vmatpush1.msra.mxu0 0.0
    %69 = vmatprep.subr.mxu0 0.0
    %70 = vmatpush1.msra.mxu0 0.0
    %71 = vmatprep.subr.mxu0 0.0
    %72 = vmatpush1.msra.mxu0 0.0
    %73 = vmatprep.subr.mxu0 0.0
    %74 = vmatpush1.msra.mxu0 0.0
    %75 = vmatprep.subr.mxu0 0.0
    %76 = vmatpush1.msra.mxu0 0.0
    %77 = vmatprep.subr.mxu0 0.0
    %78 = vmatpush1.msra.mxu0 0.0
    %79 = vmatprep.subr.mxu0 0.0
    %80 = vmatpush1.msra.mxu0 0.0
    %81 = vmatprep.subr.mxu0 0.0
    %82 = vmatpush1.msra.mxu0 0.0
    %83 = vmatprep.subr.mxu0 0.0
    %84 = vmatpush1.msra.mxu0 0.0
    %85 = vmatprep.subr.mxu0 0.0
    %86 = vmatpush1.msra.mxu0 0.0
    %87 = vmatprep.subr.mxu0 0.0
    %88 = vmatpush1.msra.mxu0 0.0
    %89 = vmatprep.subr.mxu0 0.0
    %90 = vmatpush1.msra.mxu0 0.0
    %91 = vmatprep.subr.mxu0 0.0
    %92 = vmatpush1.msra.mxu0 0.0
    %93 = vmatprep.subr.mxu0 0.0
    %94 = vmatpush1.msra.mxu0 0.0
    %95 = vmatprep.subr.mxu0 0.0
    %96 = vmatpush1.msra.mxu0 0.0
    %97 = vmatprep.subr.mxu0 0.0
    %98 = vmatpush1.msra.mxu0 0.0
    %99 = vmatprep.subr.mxu0 0.0
    %100 = vmatpush1.msra.mxu0 0.0
    %101 = vmatprep.subr.mxu0 0.0
    %102 = vmatpush1.msra.mxu0 0.0
    %103 = vmatprep.subr.mxu0 0.0
    %104 = vmatpush1.msra.mxu0 0.0
    %105 = vmatprep.subr.mxu0 0.0
    %106 = vmatpush1.msra.mxu0 0.0
    %107 = vmatprep.subr.mxu0 0.0
    %108 = vmatpush1.msra.mxu0 0.0
    %109 = vmatprep.subr.mxu0 0.0
    %110 = vmatpush1.msra.mxu0 0.0
    %111 = vmatprep.subr.mxu0 0.0
    %112 = vmatpush1.msra.mxu0 0.0
    %113 = vmatprep.subr.mxu0 0.0
    %114 = vmatpush1.msra.mxu0 0.0
    %115 = vmatprep.subr.mxu0 0.0
    %116 = vmatpush1.msra.mxu0 0.0
    %117 = vmatprep.mubr.f32.mxu0 0.0
    %118 = vmatmul.mubr.f32.gmra.mrb[0].mxu0 %v48
    %v119 = vpop.f32.mrb[0].mxu0
    %v120 = vadd.f32 0.0, %v119
    %v121 = vpop.f32.mrb[0].mxu0
    %122 = vmatprep.mubr.f32.mxu0 0.0
    %123 = vmatmul.mubr.f32.gmra.mrb[0].mxu0 %v51
    %v124 = vpop.f32.mrb[0].mxu0
    %v125 = vadd.f32 0.0, %v124
    %v126 = vpop.f32.mrb[0].mxu0
    %127 = vdwg.mxu0
    %128 = vst [vmem:[#allocation7] sm:$0xff] %v120
    %129 = vst [vmem:[#allocation7 + $0x8] sm:$0xff] %v125
    // Predicated region
    $region18: #{tpu_custom_call.1} parent=1 // pred_check
      _
    $region19: #{tpu_custom_call.1} parent=1 // pred_check_branch
      %131 = sbr.rel (0) target = $region21
    $region20: #{tpu_custom_call.1} parent=1 // pred_region
      %s133 = ssub.s32 256, 256
      %134 = vsyncadd [#allocation4], %s133
      %s135 = sshll.u32 [#allocation7], 4
      %s136 = int_to_ptr.vmem [resolvable:$true] %s135
      %141 = dma.vmem_to_hbm [thread:$0]  %s136, 256, %s2, [#allocation4], 128, 128, 8
    $region21: #{tpu_custom_call.1} parent=1 // pred_fallthru
      _
    // Predicated region
    $region22: #{tpu_custom_call.1} parent=1 // pred_check
      _
    $region23: #{tpu_custom_call.1} parent=1 // pred_check_branch
      %143 = sbr.rel (0) target = $region25
    $region24: #{tpu_custom_call.1} parent=1 // pred_region
      %144 = dma.done [#allocation4], 256
    $region25: #{tpu_custom_call.1} parent=1 // pred_fallthru
      _
    %145 = vsyncpa [#allocation3], 1
    %146 = vsyncpa [#allocation6], 1
    %147 = vsyncpa [#allocation4], 1

</llo_original>
